<compile_context>
chip_gen: v5e
topology: v5e:2x2
jax: 0.10.0
libtpu: 0.0.40
codegen_flags: <defaults>
</compile_context>

<pallas_src>
import functools

import jax
import jax.numpy as jnp
from jax.experimental import pallas as pl
from jax.experimental.pallas import tpu as pltpu

_LANES = 128


def _round_up(n: int, m: int) -> int:
    return ((n + m - 1) // m) * m


def _sublane_multiple(dtype) -> int:
    """Second-to-last-dim tiling multiple for a dtype (8 f32, 16 bf16, 32 int8)."""
    return 8 * max(1, 4 // jnp.dtype(dtype).itemsize)


def _vmem_cap_bytes() -> int:
    """Generation-aware VMEM ceiling (~75% of physical per-core VMEM)."""
    try:
        cap = getattr(pltpu.get_tpu_info(), "vmem_capacity_bytes", None)
    except Exception:
        cap = None
    if not cap:
        return 48 * 1024 * 1024       # safe on v7x (64 MiB/TC); conservative elsewhere
    return int(cap) * 3 // 4          # ~96 MiB on v5e/v6e (128 MiB), ~48 MiB on v7x


def _pa_gating_kernel(coef_ref, x_ref, w_ref, b_ref, o_ref):
    """One (batch-tile, N-tile) step of the fused paGating forward.

    coef_ref : SMEM (2,) f32   [1 - alpha/2, alpha/2]
    x_ref    : VMEM (TB, Din)        input rows (fetched once per batch step)
    w_ref    : VMEM (Din, 2*TN)      [Wv_j^T | Wg_j^T]  (resident when TN == Dp)
    b_ref    : VMEM (1, 2*TN) f32    [bv_j   | bg_j  ]
    o_ref    : VMEM (TB, TN)         gated output tile
    """
    tn = o_ref.shape[-1]

    # One MXU pass produces both projections; native-dtype operands, f32 accumulate.
    fused = jnp.dot(x_ref[...], w_ref[...], preferred_element_type=jnp.float32)
    fused = fused + b_ref[...]

    value = fused[:, :tn]        # A(x)_j   (128-lane aligned static slice)
    gate = fused[:, tn:]         # B(x)_j

    # alpha*sigmoid(g) + (1-alpha) == (1 - alpha/2) + (alpha/2)*tanh(g/2):
    # single EUP op, no exp(-g) overflow.
    scale = coef_ref[0] + coef_ref[1] * jnp.tanh(0.5 * gate)
    o_ref[...] = (value * scale).astype(o_ref.dtype)


def prepare_fused_params(wv, bv, wg, bg, dtype, block_n=None):
    """Pack PyTorch-layout Linear params for the fused kernel.

    wv, wg : (Dout, Din) value_proj / gate_proj weights (nn.Linear layout)
    bv, bg : (Dout,)     biases
    dtype  : matmul operand dtype (use bfloat16 for the native MXU path)
    block_n: lane width of one value/gate column block (multiple of 128).  Defaults
             to the whole lane-padded width Dp (single resident slab); pass a
             smaller value when Din*2*Dp no longer fits in VMEM (e.g. v7x).

    Returns (w_fused (Din, 2*Dp) in `dtype`, b_fused (1, 2*Dp) f32, block_n), with
    columns interleaved as [Wv_0 | Wg_0 | Wv_1 | Wg_1 | ...] so every N-grid step
    reads one contiguous (Din, 2*block_n) slab.
    """
    d_out, d_in = wv.shape
    dp = _round_up(d_out, _LANES)
    if block_n is None:
        block_n = dp
    block_n = min(_round_up(block_n, _LANES), dp)
    while dp % block_n:
        block_n -= _LANES
    n_blocks = dp // block_n

    wvt = jnp.zeros((d_in, dp), dtype).at[:, :d_out].set(wv.T.astype(dtype))
    wgt = jnp.zeros((d_in, dp), dtype).at[:, :d_out].set(wg.T.astype(dtype))
    w = jnp.concatenate(
        [wvt.reshape(d_in, n_blocks, block_n), wgt.reshape(d_in, n_blocks, block_n)],
        axis=-1).reshape(d_in, 2 * dp)

    bvp = jnp.zeros((dp,), jnp.float32).at[:d_out].set(bv.astype(jnp.float32))
    bgp = jnp.zeros((dp,), jnp.float32).at[:d_out].set(bg.astype(jnp.float32))
    b = jnp.concatenate(
        [bvp.reshape(n_blocks, block_n), bgp.reshape(n_blocks, block_n)],
        axis=-1).reshape(1, 2 * dp)
    return w, b, block_n


@functools.partial(jax.jit, static_argnames=("out_dim", "block_n", "block_b"))
def pa_gating_forward(x, w_fused, b_fused, alpha, *, out_dim, block_n, block_b=512):
    """x: (B, Din); w_fused: (Din, 2*Dp); b_fused: (1, 2*Dp); alpha: () scalar.

    For a "learnable" alpha, pass sigmoid(alpha_param) computed host-side.
    """
    b_rows, d_in = x.shape
    two_dp = w_fused.shape[1]
    dp = two_dp // 2
    assert dp % block_n == 0, "block_n must divide the lane-padded output width"
    num_n = dp // block_n

    # ---- batch tile: sublane-aligned, large by default, no wrapper-side pad.
    sub = _sublane_multiple(x.dtype)
    tb = min(max(_round_up(block_b, sub), sub), _round_up(b_rows, sub))
    if b_rows > sub and pl.cdiv(b_rows, tb) < 2:
        # Split a single-step batch grid in two so the "parallel" axis can feed
        # both v7x TensorCores.
        tb = _round_up(pl.cdiv(b_rows, 2), sub)
    num_b = pl.cdiv(b_rows, tb)      # ragged last tile handled by Pallas masking

    # ---- epilogue coefficients: alpha*sigmoid(g)+(1-alpha) = c0 + c1*tanh(g/2).
    alpha32 = jnp.asarray(alpha, jnp.float32)
    coef = jnp.stack([1.0 - 0.5 * alpha32, 0.5 * alpha32]).astype(jnp.float32)

    # ---- VMEM budget under a generation-aware ceiling.
    xb = jnp.dtype(x.dtype).itemsize
    wb = jnp.dtype(w_fused.dtype).itemsize
    w_bufs = 1 if num_n == 1 else 2
    vmem_est = (w_bufs * d_in * 2 * block_n * wb          # weight slab(s)
                + w_bufs * 2 * block_n * 4                # bias slab(s)
                + 2 * tb * d_in * xb                      # x (double-buffered)
                + 2 * tb * block_n * xb                   # out (double-buffered)
                + 3 * tb * 2 * block_n * 4)               # f32 fused + temporaries
    vmem_limit = int(min(max(2 * vmem_est, 16 * 1024 * 1024), _vmem_cap_bytes()))

    # ---- specs. x block index is constant across the inner N axis (fetched once
    # per batch step); weights are resident across the whole grid when num_n == 1.
    if tb <= 128:
        x_spec = pl.BlockSpec((tb, d_in), lambda i, j: (i, 0),
                              pipeline_mode=pl.Buffered(3))
        o_spec = pl.BlockSpec((tb, block_n), lambda i, j: (i, j),
                              pipeline_mode=pl.Buffered(3))
    else:
        x_spec = pl.BlockSpec((tb, d_in), lambda i, j: (i, 0))
        o_spec = pl.BlockSpec((tb, block_n), lambda i, j: (i, j))
    w_spec = pl.BlockSpec((d_in, 2 * block_n), lambda i, j: (0, j))
    b_spec = pl.BlockSpec((1, 2 * block_n), lambda i, j: (0, j))

    cost = pl.CostEstimate(
        flops=2 * b_rows * d_in * two_dp,
        transcendentals=b_rows * dp,
        bytes_accessed=(b_rows * d_in * xb + d_in * two_dp * wb
                        + two_dp * 4 + b_rows * dp * xb))

    out = pl.pallas_call(
        _pa_gating_kernel,
        out_shape=jax.ShapeDtypeStruct((b_rows, dp), x.dtype),
        grid=(num_b, num_n),
        in_specs=[
            pl.BlockSpec(memory_space=pltpu.SMEM),   # epilogue coefficients
            x_spec, w_spec, b_spec,
        ],
        out_specs=o_spec,
        compiler_params=pltpu.CompilerParams(
            dimension_semantics=("parallel", "arbitrary"),
            vmem_limit_bytes=vmem_limit),
        cost_estimate=cost,
    )(coef, x, w_fused, b_fused)

    # Lane-padded (B, Dp) is the natural output of the kernel (unmasked 128-wide
    # stores); trim only when the consumer needs exactly out_dim columns.
    return out if dp == out_dim else out[:, :out_dim]


def _init_linear(key, in_dim, out_dim):
    """Deterministic nn.Linear-style init: U(-1/sqrt(in), 1/sqrt(in))."""
    kw, kb = jax.random.split(key)
    bound = 1.0 / jnp.sqrt(jnp.float32(in_dim))
    w = jax.random.uniform(kw, (out_dim, in_dim), jnp.float32, -bound, bound)
    b = jax.random.uniform(kb, (out_dim,), jnp.float32, -bound, bound)
    return w, b


def _reference(x, wv, bv, wg, bg, alpha):
    value = x @ wv.T + bv
    gate = x @ wg.T + bg
    return value * (alpha * jax.nn.sigmoid(gate) + (1.0 - alpha))


if __name__ == "__main__":
    key = jax.random.PRNGKey(0)
    k_x, k_v, k_g = jax.random.split(key, 3)

    batch, input_dim, output_dim = 384, 64, 96
    alpha = jnp.float32(0.5)   # fixed alpha; "learnable" = sigmoid(param) host-side

    x = jax.random.normal(k_x, (batch, input_dim), jnp.float32)
    wv, bv = _init_linear(k_v, input_dim, output_dim)   # value_proj
    wg, bg = _init_linear(k_g, input_dim, output_dim)   # gate_proj

    # ---- f32 run (tight correctness check) ----------------------------------
    w_fused, b_fused, block_n = prepare_fused_params(wv, bv, wg, bg, jnp.float32)
    out = pa_gating_forward(x, w_fused, b_fused, alpha,
                            out_dim=output_dim, block_n=block_n)
    out = jax.block_until_ready(out)
    ref = _reference(x, wv, bv, wg, bg, alpha)
    assert out.shape == (batch, output_dim)
    assert jnp.allclose(out, ref, atol=2e-3, rtol=2e-3), "f32 mismatch vs reference"

    # ---- bf16 run (native MXU path; halves x/weight HBM + VMEM bytes) -------
    w_bf, b_bf, block_n_bf = prepare_fused_params(wv, bv, wg, bg, jnp.bfloat16)
    out_bf = pa_gating_forward(x.astype(jnp.bfloat16), w_bf, b_bf, alpha,
                               out_dim=output_dim, block_n=block_n_bf)
    out_bf = jax.block_until_ready(out_bf)
    ref_bf = _reference(x.astype(jnp.bfloat16).astype(jnp.float32),
                        wv.astype(jnp.bfloat16).astype(jnp.float32), bv,
                        wg.astype(jnp.bfloat16).astype(jnp.float32), bg, alpha)
    assert out_bf.shape == (batch, output_dim)
    assert jnp.allclose(out_bf.astype(jnp.float32), ref_bf, atol=3e-2, rtol=3e-2), \
        "bf16 mismatch vs reference"

    print("KERNEL_OK")
</pallas_src>

<mosaic_0001>
module attributes {stable_mosaic.version = 11 : i64} {
  func.func @_pa_gating_kernel(%arg0: i32, %arg1: i32, %arg2: memref<2xf32, #tpu.memory_space<smem>>, %arg3: memref<192x64xf32, #tpu.memory_space<vmem>>, %arg4: memref<64x256xf32, #tpu.memory_space<vmem>>, %arg5: memref<1x256xf32, #tpu.memory_space<vmem>>, %arg6: memref<192x128xf32, #tpu.memory_space<vmem>>) attributes {dimension_semantics = [#tpu.dimension_semantics<parallel>, #tpu.dimension_semantics<arbitrary>], iteration_bounds = array<i64: 2, 1>, scalar_prefetch = 0 : i64, scratch_operands = 0 : i64, tpu.core_type = #tpu.core_type<tc>, window_params = [{transform_indices = @transform_0, window_bounds = array<i64: 2>}, {transform_indices = @transform_1, window_bounds = array<i64: 192, 64>}, {transform_indices = @transform_2, window_bounds = array<i64: 64, 256>}, {transform_indices = @transform_3, window_bounds = array<i64: 1, 256>}, {transform_indices = @transform_4, window_bounds = array<i64: 192, 128>}]} {
    %c0 = arith.constant 0 : index
    %c0_0 = arith.constant 0 : index
    %0 = vector.load %arg3[%c0, %c0_0] : memref<192x64xf32, #tpu.memory_space<vmem>>, vector<192x64xf32>
    %c0_1 = arith.constant 0 : index
    %c0_2 = arith.constant 0 : index
    %1 = vector.load %arg4[%c0_1, %c0_2] : memref<64x256xf32, #tpu.memory_space<vmem>>, vector<64x256xf32>
    %cst = arith.constant dense<0.000000e+00> : vector<192x256xf32>
    %2 = tpu.matmul %0, %1, %cst {dimension_numbers = #tpu.dot_dimension_numbers<[1], [0], [0], [1], [0, 0, 1, 1], [], []>} : vector<192x64xf32>, vector<64x256xf32>, vector<192x256xf32> -> vector<192x256xf32>
    %c0_3 = arith.constant 0 : index
    %c0_4 = arith.constant 0 : index
    %3 = vector.load %arg5[%c0_3, %c0_4] : memref<1x256xf32, #tpu.memory_space<vmem>>, vector<1x256xf32>
    %4 = vector.broadcast %3 : vector<1x256xf32> to vector<192x256xf32>
    %5 = arith.addf %2, %4 : vector<192x256xf32>
    %6 = vector.extract_strided_slice %5 {offsets = [0, 0], sizes = [192, 128], strides = [1, 1]} : vector<192x256xf32> to vector<192x128xf32>
    %7 = vector.extract_strided_slice %5 {offsets = [0, 128], sizes = [192, 128], strides = [1, 1]} : vector<192x256xf32> to vector<192x128xf32>
    %c0_5 = arith.constant 0 : index
    %8 = memref.load %arg2[%c0_5] : memref<2xf32, #tpu.memory_space<smem>>
    %c1 = arith.constant 1 : index
    %9 = memref.load %arg2[%c1] : memref<2xf32, #tpu.memory_space<smem>>
    %cst_6 = arith.constant 5.000000e-01 : f32
    %10 = vector.broadcast %cst_6 : f32 to vector<192x128xf32>
    %11 = arith.mulf %10, %7 : vector<192x128xf32>
    %12 = math.tanh %11 : vector<192x128xf32>
    %13 = vector.broadcast %9 : f32 to vector<192x128xf32>
    %14 = arith.mulf %13, %12 : vector<192x128xf32>
    %15 = vector.broadcast %8 : f32 to vector<192x128xf32>
    %16 = arith.addf %15, %14 : vector<192x128xf32>
    %17 = arith.mulf %6, %16 : vector<192x128xf32>
    %c0_7 = arith.constant 0 : index
    %c0_8 = arith.constant 0 : index
    %18 = vector.load %arg6[%c0_7, %c0_8] : memref<192x128xf32, #tpu.memory_space<vmem>>, vector<192x128xf32>
    tpu.vector_store %arg6[%c0_7, %c0_8], %17 {strides = array<i32>} : memref<192x128xf32, #tpu.memory_space<vmem>>, vector<192x128xf32>,
    return
  }
  func.func @transform_0(%arg0: i32, %arg1: i32) -> i32 {
    %c0_i32 = arith.constant 0 : i32
    %c0_i32_0 = arith.constant 0 : i32
    return %c0_i32 : i32
  }
  func.func @transform_1(%arg0: i32, %arg1: i32) -> (i32, i32) {
    %c0_i32 = arith.constant 0 : i32
    %c0_i32_0 = arith.constant 0 : i32
    return %arg0, %c0_i32 : i32, i32
  }
  func.func @transform_2(%arg0: i32, %arg1: i32) -> (i32, i32) {
    %c0_i32 = arith.constant 0 : i32
    %c0_i32_0 = arith.constant 0 : i32
    return %c0_i32, %arg1 : i32, i32
  }
  func.func @transform_3(%arg0: i32, %arg1: i32) -> (i32, i32) {
    %c0_i32 = arith.constant 0 : i32
    %c0_i32_0 = arith.constant 0 : i32
    return %c0_i32, %arg1 : i32, i32
  }
  func.func @transform_4(%arg0: i32, %arg1: i32) -> (i32, i32) {
    %c0_i32 = arith.constant 0 : i32
    return %arg0, %arg1 : i32, i32
  }
}

</mosaic_0001>

<llo_original>
// kernel: pa_gating_forward.1
$region0: #{pa_gating_forward.1}
  #allocation0 [shape = 'u32[]', space=smem, size = 0x4, offset = 0x4, fixed_abs, tag = 'smem constant byte address 0x4 - core index']
  #allocation1 [shape = 'u32[72,128]{1,0:T(1,128)}', space=vmem, size = 0x9000, scoped, tag = 'internal scratch']
  %s0 = inlined_call_operand.vmem [shape: f32[2], index: 0, kind: input, shape index: {}]
  %s1 = inlined_call_operand.vmem [shape: f32[384,64], index: 1, kind: input, shape index: {}]
  %s2 = inlined_call_operand.vmem [shape: f32[64,256], index: 2, kind: input, shape index: {}]
  %s3 = inlined_call_operand.vmem [shape: f32[1,256], index: 3, kind: input, shape index: {}]
  %s4 = inlined_call_operand.vmem [shape: f32[384,128], index: 4, kind: output, shape index: {}]
  %s5 = sld [smem:[#allocation0]]
  $region53: #{pa_gating_forward.1} parent=0
    _
  %s7 = ssub.s32 1, %s5
  %s8 = scalar_select 0, %s7, %s5
  $region1: #{pa_gating_forward.1} parent=0
    #allocation2 [shape = 'u8[512]{0}', space=smem, size = 0x200, scoped, tag = 'input window, operand 0, single buffered']
    #allocation3 [shape = 's32[2]{0}', space=sflag, size = 0x8, scoped, tag = 'scoped memory for pa_gating_forward.1']
    %9 = vsyncpa [#allocation3], 0
    loop: start=0, step=1, limit=4
    $region2: #{pa_gating_forward.1} parent=1 // loop_pre_header
      _
    $region3: #{pa_gating_forward.1} parent=1 // loop_header
      %s11 = sphi 0, %s15
      %p12 = scmp.ge.s32.totalorder %s11, 4
      %s18 = sphi 0, %s30
      %s19 = sphi 0, %s26
      %s20 = sphi 0, %s18
      %s21 = sphi 0, %s19
      %s22 = sphi 0, %s20
      %s23 = sphi 0, %s21
      %s31 = sphi 0, %s31
      %s33 = sphi 0, %s31
      %s34 = sphi 0, %s33
      %s48 = sphi 0, %s34
      %s54 = sphi 0, %s56
      %s57 = sphi 0, %s54
      %s58 = sphi 0, %s57
      %s74 = sphi 0, %s58
      %s80 = sphi 0, %s82
      %s83 = sphi 0, %s80
      %s84 = sphi 0, %s83
      %s100 = sphi 0, %s84
      %s106 = sphi 0, %s108
      %s109 = sphi 0, %s106
      %s110 = sphi 0, %s109
      %s126 = sphi 0, %s110
      %s134 = sphi 0, %s136
      %s137 = sphi 0, %s134
      %s138 = sphi 0, %s137
      %s154 = sphi 0, %s138
    $region4: #{pa_gating_forward.1} parent=1 // loop_header_branch
      %14 = sbr.rel (%p12) target = $region8
    $region5: #{pa_gating_forward.1} parent=1 // loop_body
      %s16 = ssub.s32 %s11, 1
      %s17 = ssub.s32 %s11, 2
      %s24 = sadd.s32 1, %s19
      %p25 = scmp.ge.s32.totalorder %s24, 1
      %s26 = scalar_select %p25, 0, %s24
      %s27 = sadd.s32 1, %s18
      %s28 = scalar_select %p25, %s27, %s18
      %p29 = scmp.ge.s32.totalorder %s28, 2
      %s30 = scalar_select %p29, 0, %s28
      %s32 = sadd.s32 %s31, 1
      %p35 = scmp.eq.s32.totalorder %s11, 1
      %p36 = scmp.ne.s32.totalorder %s31, %s33
      %p37 = scmp.eq.s32.totalorder %s11, 0
      %p38 = por %p36, %p37
      %p39 = scmp.ne.s32.totalorder %s31, %s33
      %p40 = scmp.eq.s32.totalorder %s16, 1
      %p41 = por %p39, %p40
      %p42 = scmp.ne.s32.totalorder %s33, %s34
      %p43 = scmp.eq.s32.totalorder %s16, 0
      %p44 = por %p42, %p43
      %p45 = scmp.ne.s32.totalorder %s33, %s34
      %p46 = scmp.eq.s32.totalorder %s17, 1
      %p47 = por %p45, %p46
      %p49 = scmp.ne.s32.totalorder %s34, %s48
      %p50 = scmp.eq.s32.totalorder %s17, 0
      %p51 = por %p49, %p50
      %s52 = ssub.s32 %s18, %s30
      %p53 = scmp.eq.s32.totalorder %s52, 0
      %s55 = sadd.s32 %s54, 1
      %s56 = scalar_select %p53, %s54, %s55
      %p59 = pneg %p53
      %p60 = scmp.eq.s32.totalorder %s11, 1
      %p61 = por %p59, %p60
      %p62 = scmp.ne.s32.totalorder %s54, %s57
      %p63 = scmp.eq.s32.totalorder %s11, 0
      %p64 = por %p62, %p63
      %p65 = scmp.ne.s32.totalorder %s54, %s57
      %p66 = scmp.eq.s32.totalorder %s16, 1
      %p67 = por %p65, %p66
      %p68 = scmp.ne.s32.totalorder %s57, %s58
      %p69 = scmp.eq.s32.totalorder %s16, 0
      %p70 = por %p68, %p69
      %p71 = scmp.ne.s32.totalorder %s57, %s58
      %p72 = scmp.eq.s32.totalorder %s17, 1
      %p73 = por %p71, %p72
      %p75 = scmp.ne.s32.totalorder %s58, %s74
      %p76 = scmp.eq.s32.totalorder %s17, 0
      %p77 = por %p75, %p76
      %s78 = ssub.s32 %s19, %s26
      %p79 = scmp.eq.s32.totalorder %s78, 0
      %s81 = sadd.s32 %s80, 1
      %s82 = scalar_select %p79, %s80, %s81
      %p85 = pneg %p79
      %p86 = scmp.eq.s32.totalorder %s11, 1
      %p87 = por %p85, %p86
      %p88 = scmp.ne.s32.totalorder %s80, %s83
      %p89 = scmp.eq.s32.totalorder %s11, 0
      %p90 = por %p88, %p89
      %p91 = scmp.ne.s32.totalorder %s80, %s83
      %p92 = scmp.eq.s32.totalorder %s16, 1
      %p93 = por %p91, %p92
      %p94 = scmp.ne.s32.totalorder %s83, %s84
      %p95 = scmp.eq.s32.totalorder %s16, 0
      %p96 = por %p94, %p95
      %p97 = scmp.ne.s32.totalorder %s83, %s84
      %p98 = scmp.eq.s32.totalorder %s17, 1
      %p99 = por %p97, %p98
      %p101 = scmp.ne.s32.totalorder %s84, %s100
      %p102 = scmp.eq.s32.totalorder %s17, 0
      %p103 = por %p101, %p102
      %s104 = ssub.s32 %s19, %s26
      %p105 = scmp.eq.s32.totalorder %s104, 0
      %s107 = sadd.s32 %s106, 1
      %s108 = scalar_select %p105, %s106, %s107
      %p111 = pneg %p105
      %p112 = scmp.eq.s32.totalorder %s11, 1
      %p113 = por %p111, %p112
      %p114 = scmp.ne.s32.totalorder %s106, %s109
      %p115 = scmp.eq.s32.totalorder %s11, 0
      %p116 = por %p114, %p115
      %p117 = scmp.ne.s32.totalorder %s106, %s109
      %p118 = scmp.eq.s32.totalorder %s16, 1
      %p119 = por %p117, %p118
      %p120 = scmp.ne.s32.totalorder %s109, %s110
      %p121 = scmp.eq.s32.totalorder %s16, 0
      %p122 = por %p120, %p121
      %p123 = scmp.ne.s32.totalorder %s109, %s110
      %p124 = scmp.eq.s32.totalorder %s17, 1
      %p125 = por %p123, %p124
      %p127 = scmp.ne.s32.totalorder %s110, %s126
      %p128 = scmp.eq.s32.totalorder %s17, 0
      %p129 = por %p127, %p128
      %s130 = ssub.s32 %s18, %s30
      %s131 = ssub.s32 %s19, %s26
      %s132 = sor.u32 %s130, %s131
      %p133 = scmp.eq.s32.totalorder %s132, 0
      %s135 = sadd.s32 %s134, 1
      %s136 = scalar_select %p133, %s134, %s135
      %p139 = pneg %p133
      %p140 = scmp.eq.s32.totalorder %s11, 1
      %p141 = por %p139, %p140
      %p142 = scmp.ne.s32.totalorder %s134, %s137
      %p143 = scmp.eq.s32.totalorder %s11, 0
      %p144 = por %p142, %p143
      %p145 = scmp.ne.s32.totalorder %s134, %s137
      %p146 = scmp.eq.s32.totalorder %s16, 1
      %p147 = por %p145, %p146
      %p148 = scmp.ne.s32.totalorder %s137, %s138
      %p149 = scmp.eq.s32.totalorder %s16, 0
      %p150 = por %p148, %p149
      %p151 = scmp.ne.s32.totalorder %s137, %s138
      %p152 = scmp.eq.s32.totalorder %s17, 1
      %p153 = por %p151, %p152
      %p155 = scmp.ne.s32.totalorder %s138, %s154
      %p156 = scmp.eq.s32.totalorder %s17, 0
      %p157 = por %p155, %p156
      %p158 = scmp.le.s32.totalorder 1, %s11
      %p159 = scmp.lt.s32.totalorder %s11, 3
      %p160 = pnand %p158, %p159
      %p161 = pneg %p160
      // Predicated region
      $region9: #{pa_gating_forward.1} parent=5 // pred_check
        _
      $region10: #{pa_gating_forward.1} parent=5 // pred_check_branch
        %163 = sbr.rel (%p160) target = $region12
      $region11: #{pa_gating_forward.1} parent=5 // pred_region
        %s164 = ssub.s32 %s11, 1
        // Predicated region
        $region13: #{pa_gating_forward.1} parent=11 // pred_check
          %p165 = pneg %p44
        $region14: #{pa_gating_forward.1} parent=11 // pred_check_branch
          %167 = sbr.rel (%p165) target = $region16
        $region15: #{pa_gating_forward.1} parent=11 // pred_region
          %169 = vsyncadd [#allocation3], 0
          %s171 = sshll.u32 %s0, 4
          %s172 = int_to_ptr.vmem [resolvable:$true] %s171
          %174 = dma.vmem_to_smem %s172, 16, [#allocation2], [#allocation3]
        $region16: #{pa_gating_forward.1} parent=11 // pred_fallthru
          _
        // Predicated region
        $region17: #{pa_gating_forward.1} parent=11 // pred_check
          %p175 = pneg %p96
        $region18: #{pa_gating_forward.1} parent=11 // pred_check_branch
          %177 = sbr.rel (%p175) target = $region20
        $region19: #{pa_gating_forward.1} parent=11 // pred_region
          %s178 = smul.u32 2, %s21
          %p179 = scmp.lt.s32.totalorder %s178, 1
          %s180 = scalar_select %p179, %s178, 1
          %s181 = smul.addr %s180, 8
          %s182 = scalar_lea.vmem %s2, %s181
          %s183 = smul.u32 2, %s21
        $region20: #{pa_gating_forward.1} parent=11 // pred_fallthru
          _
        // Predicated region
        $region21: #{pa_gating_forward.1} parent=11 // pred_check
          %p184 = pneg %p122
        $region22: #{pa_gating_forward.1} parent=11 // pred_check_branch
          %186 = sbr.rel (%p184) target = $region24
        $region23: #{pa_gating_forward.1} parent=11 // pred_region
          %s187 = smul.u32 2, %s21
          %p188 = scmp.lt.s32.totalorder %s187, 1
          %s189 = scalar_select %p188, %s187, 1
          %s190 = scalar_lea.vmem %s3, %s189
          %s191 = smul.u32 2, %s21
        $region24: #{pa_gating_forward.1} parent=11 // pred_fallthru
          _
      $region12: #{pa_gating_forward.1} parent=5 // pred_fallthru
        _
      %p192 = scmp.lt.s32.totalorder %s11, 2
      // Predicated region
      $region25: #{pa_gating_forward.1} parent=5 // pred_check
        %p193 = pneg %p192
      $region26: #{pa_gating_forward.1} parent=5 // pred_check_branch
        %195 = sbr.rel (%p193) target = $region28
      $region27: #{pa_gating_forward.1} parent=5 // pred_region
        // Predicated region
        $region29: #{pa_gating_forward.1} parent=27 // pred_check
          %p196 = pneg %p64
        $region30: #{pa_gating_forward.1} parent=27 // pred_check_branch
          %198 = sbr.rel (%p196) target = $region32
        $region31: #{pa_gating_forward.1} parent=27 // pred_region
          %s199 = smul.u32 24, %s18
          %p200 = scmp.lt.s32.totalorder %s199, 47
          %s201 = scalar_select %p200, %s199, 47
          %s202 = smul.addr %s201, 8
          %s203 = scalar_lea.vmem %s1, %s202
          %s204 = smul.u32 24, %s18
        $region32: #{pa_gating_forward.1} parent=27 // pred_fallthru
          _
      $region28: #{pa_gating_forward.1} parent=5 // pred_fallthru
        _
      %p205 = scmp.le.s32.totalorder 1, %s11
      %p206 = scmp.lt.s32.totalorder %s11, 3
      %p207 = pnand %p205, %p206
      %p208 = pneg %p207
      // Predicated region
      $region33: #{pa_gating_forward.1} parent=5 // pred_check
        _
      $region34: #{pa_gating_forward.1} parent=5 // pred_check_branch
        %210 = sbr.rel (%p207) target = $region36
      $region35: #{pa_gating_forward.1} parent=5 // pred_region
        %s211 = ssub.s32 %s11, 1
        // Predicated region
        $region37: #{pa_gating_forward.1} parent=35 // pred_check
          %p212 = pneg %p44
        $region38: #{pa_gating_forward.1} parent=35 // pred_check_branch
          %214 = sbr.rel (%p212) target = $region40
        $region39: #{pa_gating_forward.1} parent=35 // pred_region
          %216 = dma.done [#allocation3], 16
        $region40: #{pa_gating_forward.1} parent=35 // pred_fallthru
          _
        %217 = sfence
        %p218 = pneg %p44
        %p219 = pneg %p41
        %s220 = smul.u32 24, %s20
        %p221 = scmp.lt.s32.totalorder %s220, 47
        %s222 = scalar_select %p221, %s220, 47
        %s223 = smul.addr %s222, 8
        %s224 = scalar_lea.vmem %s1, %s223
        %p225 = pneg %p70
        %p226 = pneg %p67
        %s227 = smul.u32 2, %s21
        %p228 = scmp.lt.s32.totalorder %s227, 1
        %s229 = scalar_select %p228, %s227, 1
        %s230 = smul.addr %s229, 8
        %s231 = scalar_lea.vmem %s2, %s230
        %p232 = pneg %p96
        %p233 = pneg %p93
        %s234 = smul.u32 2, %s21
        %p235 = scmp.lt.s32.totalorder %s234, 1
        %s236 = scalar_select %p235, %s234, 1
        %s237 = scalar_lea.vmem %s3, %s236
        %p238 = pneg %p122
        %p239 = pneg %p119
        %p240 = pneg %p150
        %p241 = pneg %p147
        %s242 = smul.u32 24, %s20
        %p243 = scmp.lt.s32.totalorder %s242, 47
        %s244 = scalar_select %p243, %s242, 47
        %p245 = scmp.lt.s32.totalorder %s21, 0
        %s246 = scalar_select %p245, %s21, 0
        %s247 = sadd.s32 %s246, %s244
        %s248 = smul.addr %s247, 8
        %s249 = scalar_lea.vmem %s4, %s248
        %s250 = smul.u32 24, %s20
        %p251 = scmp.lt.s32.totalorder %s250, 47
        %s252 = scalar_select %p251, %s250, 47
        %s253 = smul.addr %s252, 8
        %s254 = scalar_lea.vmem %s1, %s253
        %s255 = smul.u32 24, %s20
        %s256 = smul.u32 2, %s21
        %p257 = scmp.lt.s32.totalorder %s256, 1
        %s258 = scalar_select %p257, %s256, 1
        %s259 = smul.addr %s258, 8
        %s260 = scalar_lea.vmem %s2, %s259
        %s261 = smul.u32 2, %s21
        %s262 = smul.u32 2, %s21
        %p263 = scmp.lt.s32.totalorder %s262, 1
        %s264 = scalar_select %p263, %s262, 1
        %s265 = scalar_lea.vmem %s3, %s264
        %s266 = smul.u32 2, %s21
        %s267 = smul.u32 24, %s20
        %p268 = scmp.lt.s32.totalorder %s267, 47
        %s269 = scalar_select %p268, %s267, 47
        %p270 = scmp.lt.s32.totalorder %s21, 0
        %s271 = scalar_select %p270, %s21, 0
        %s272 = sadd.s32 %s271, %s269
        %s273 = smul.addr %s272, 8
        %s274 = scalar_lea.vmem %s4, %s273
        %s275 = smul.u32 24, %s20
        %v276 = vld [vmem:[%s254] sm:$0xff]
        %v277 = vld [vmem:[%s254 + $0x8] sm:$0xff]
        %v278 = vld [vmem:[%s254 + $0x10] sm:$0xff]
        %v279 = vld [vmem:[%s254 + $0x18] sm:$0xff]
        %v280 = vld [vmem:[%s254 + $0x20] sm:$0xff]
        %v281 = vld [vmem:[%s254 + $0x28] sm:$0xff]
        %v282 = vld [vmem:[%s254 + $0x30] sm:$0xff]
        %v283 = vld [vmem:[%s254 + $0x38] sm:$0xff]
        %v284 = vld [vmem:[%s254 + $0x40] sm:$0xff]
        %v285 = vld [vmem:[%s254 + $0x48] sm:$0xff]
        %v286 = vld [vmem:[%s254 + $0x50] sm:$0xff]
        %v287 = vld [vmem:[%s254 + $0x58] sm:$0xff]
        %v288 = vld [vmem:[%s254 + $0x60] sm:$0xff]
        %v289 = vld [vmem:[%s254 + $0x68] sm:$0xff]
        %v290 = vld [vmem:[%s254 + $0x70] sm:$0xff]
        %v291 = vld [vmem:[%s254 + $0x78] sm:$0xff]
        %v292 = vld [vmem:[%s254 + $0x80] sm:$0xff]
        %v293 = vld [vmem:[%s254 + $0x88] sm:$0xff]
        %v294 = vld [vmem:[%s254 + $0x90] sm:$0xff]
        %v295 = vld [vmem:[%s254 + $0x98] sm:$0xff]
        %v296 = vld [vmem:[%s254 + $0xa0] sm:$0xff]
        %v297 = vld [vmem:[%s254 + $0xa8] sm:$0xff]
        %v298 = vld [vmem:[%s254 + $0xb0] sm:$0xff]
        %v299 = vld [vmem:[%s254 + $0xb8] sm:$0xff]
        %v300 = vld [vmem:[%s260] sm:$0xff]
        %v301 = vld [vmem:[%s260 + $0x8] sm:$0xff]
        %v302 = vld [vmem:[%s260 + $0x10] sm:$0xff]
        %v303 = vld [vmem:[%s260 + $0x18] sm:$0xff]
        %v304 = vld [vmem:[%s260 + $0x20] sm:$0xff]
        %v305 = vld [vmem:[%s260 + $0x28] sm:$0xff]
        %v306 = vld [vmem:[%s260 + $0x30] sm:$0xff]
        %v307 = vld [vmem:[%s260 + $0x38] sm:$0xff]
        %v308 = vld [vmem:[%s260 + $0x40] sm:$0xff]
        %v309 = vld [vmem:[%s260 + $0x48] sm:$0xff]
        %v310 = vld [vmem:[%s260 + $0x50] sm:$0xff]
        %v311 = vld [vmem:[%s260 + $0x58] sm:$0xff]
        %v312 = vld [vmem:[%s260 + $0x60] sm:$0xff]
        %v313 = vld [vmem:[%s260 + $0x68] sm:$0xff]
        %v314 = vld [vmem:[%s260 + $0x70] sm:$0xff]
        %v315 = vld [vmem:[%s260 + $0x78] sm:$0xff]
        %v316 = vld [vmem:[%s265] sm:$0x3]
        %v318 = vperm.slane %v316, 0
        %v319 = vperm.slane %v316, 1
        %vm322 = vcmask 523264
        %v324 = vsel %vm322, %v276, 0
        %v327 = vsel %vm322, %v277, 0
        %v330 = vsel %vm322, %v278, 0
        %v333 = vsel %vm322, %v279, 0
        %v336 = vsel %vm322, %v280, 0
        %v339 = vsel %vm322, %v281, 0
        %v342 = vsel %vm322, %v282, 0
        %v345 = vsel %vm322, %v283, 0
        %v348 = vsel %vm322, %v284, 0
        %v351 = vsel %vm322, %v285, 0
        %v354 = vsel %vm322, %v286, 0
        %v357 = vsel %vm322, %v287, 0
        %v360 = vsel %vm322, %v288, 0
        %v363 = vsel %vm322, %v289, 0
        %v366 = vsel %vm322, %v290, 0
        %v369 = vsel %vm322, %v291, 0
        %v372 = vsel %vm322, %v292, 0
        %v375 = vsel %vm322, %v293, 0
        %v378 = vsel %vm322, %v294, 0
        %v381 = vsel %vm322, %v295, 0
        %v384 = vsel %vm322, %v296, 0
        %v387 = vsel %vm322, %v297, 0
        %v390 = vsel %vm322, %v298, 0
        %v393 = vsel %vm322, %v299, 0
        %395 = vmatpush.msra.mxu0 0.0
        %396 = vmatpush.msra.mxu0 0.0
        %397 = vmatpush.msra.mxu0 0.0
        %398 = vmatpush.msra.mxu0 0.0
        %399 = vmatpush.msra.mxu0 0.0
        %400 = vmatpush.msra.mxu0 0.0
        %401 = vmatpush.msra.mxu0 0.0
        %402 = vmatpush.msra.mxu0 0.0
        %403 = vmatpush.msra.mxu0 %v314
        %404 = vmatpush.msra.mxu0 %v312
        %405 = vmatpush.msra.mxu0 %v310
        %406 = vmatpush.msra.mxu0 %v308
        %407 = vmatpush.msra.mxu0 %v306
        %408 = vmatpush.msra.mxu0 %v304
        %409 = vmatpush.msra.mxu0 %v302
        %410 = vmatpush.msra.mxu0 %v300
        %411 = vmatmul.f32.gmra.mxu0 %v324
        %v412 = vpop.f32.mrf.mxu0
        %v413 = vadd.f32 %v318, %v412
        %414 = vmatmul.f32.gmra.mxu0 %v327
        %v415 = vpop.f32.mrf.mxu0
        %v416 = vadd.f32 %v318, %v415
        %417 = vmatmul.f32.gmra.mxu0 %v330
        %v418 = vpop.f32.mrf.mxu0
        %v419 = vadd.f32 %v318, %v418
        %420 = vmatmul.f32.gmra.mxu0 %v333
        %v421 = vpop.f32.mrf.mxu0
        %v422 = vadd.f32 %v318, %v421
        %423 = vmatmul.f32.gmra.mxu0 %v336
        %v424 = vpop.f32.mrf.mxu0
        %v425 = vadd.f32 %v318, %v424
        %426 = vmatmul.f32.gmra.mxu0 %v339
        %v427 = vpop.f32.mrf.mxu0
        %v428 = vadd.f32 %v318, %v427
        %429 = vmatmul.f32.gmra.mxu0 %v342
        %v430 = vpop.f32.mrf.mxu0
        %v431 = vadd.f32 %v318, %v430
        %432 = vmatmul.f32.gmra.mxu0 %v345
        %v433 = vpop.f32.mrf.mxu0
        %v434 = vadd.f32 %v318, %v433
        %435 = vmatmul.f32.gmra.mxu0 %v348
        %v436 = vpop.f32.mrf.mxu0
        %v437 = vadd.f32 %v318, %v436
        %438 = vmatmul.f32.gmra.mxu0 %v351
        %v439 = vpop.f32.mrf.mxu0
        %v440 = vadd.f32 %v318, %v439
        %441 = vmatmul.f32.gmra.mxu0 %v354
        %v442 = vpop.f32.mrf.mxu0
        %v443 = vadd.f32 %v318, %v442
        %444 = vmatmul.f32.gmra.mxu0 %v357
        %v445 = vpop.f32.mrf.mxu0
        %v446 = vadd.f32 %v318, %v445
        %447 = vmatmul.f32.gmra.mxu0 %v360
        %v448 = vpop.f32.mrf.mxu0
        %v449 = vadd.f32 %v318, %v448
        %450 = vmatmul.f32.gmra.mxu0 %v363
        %v451 = vpop.f32.mrf.mxu0
        %v452 = vadd.f32 %v318, %v451
        %453 = vmatmul.f32.gmra.mxu0 %v366
        %v454 = vpop.f32.mrf.mxu0
        %v455 = vadd.f32 %v318, %v454
        %456 = vmatmul.f32.gmra.mxu0 %v369
        %v457 = vpop.f32.mrf.mxu0
        %v458 = vadd.f32 %v318, %v457
        %459 = vmatmul.f32.gmra.mxu0 %v372
        %v460 = vpop.f32.mrf.mxu0
        %v461 = vadd.f32 %v318, %v460
        %462 = vmatmul.f32.gmra.mxu0 %v375
        %v463 = vpop.f32.mrf.mxu0
        %v464 = vadd.f32 %v318, %v463
        %465 = vmatmul.f32.gmra.mxu0 %v378
        %v466 = vpop.f32.mrf.mxu0
        %v467 = vadd.f32 %v318, %v466
        %468 = vmatmul.f32.gmra.mxu0 %v381
        %v469 = vpop.f32.mrf.mxu0
        %v470 = vadd.f32 %v318, %v469
        %471 = vmatmul.f32.gmra.mxu0 %v384
        %v472 = vpop.f32.mrf.mxu0
        %v473 = vadd.f32 %v318, %v472
        %474 = vmatmul.f32.gmra.mxu0 %v387
        %v475 = vpop.f32.mrf.mxu0
        %v476 = vadd.f32 %v318, %v475
        %477 = vmatmul.f32.gmra.mxu0 %v390
        %v478 = vpop.f32.mrf.mxu0
        %v479 = vadd.f32 %v318, %v478
        %480 = vmatmul.f32.gmra.mxu0 %v393
        %v481 = vpop.f32.mrf.mxu0
        %v482 = vadd.f32 %v318, %v481
        %483 = vdwg.mxu0
        %484 = vmatpush.msra.mxu0 0.0
        %485 = vmatpush.msra.mxu0 0.0
        %486 = vmatpush.msra.mxu0 0.0
        %487 = vmatpush.msra.mxu0 0.0
        %488 = vmatpush.msra.mxu0 0.0
        %489 = vmatpush.msra.mxu0 0.0
        %490 = vmatpush.msra.mxu0 0.0
        %491 = vmatpush.msra.mxu0 0.0
        %492 = vmatpush.msra.mxu0 %v315
        %493 = vmatpush.msra.mxu0 %v313
        %494 = vmatpush.msra.mxu0 %v311
        %495 = vmatpush.msra.mxu0 %v309
        %496 = vmatpush.msra.mxu0 %v307
        %497 = vmatpush.msra.mxu0 %v305
        %498 = vmatpush.msra.mxu0 %v303
        %499 = vmatpush.msra.mxu0 %v301
        %500 = vmatmul.f32.gmra.mxu0 %v324
        %v501 = vpop.f32.mrf.mxu0
        %v502 = vadd.f32 %v319, %v501
        %503 = vmatmul.f32.gmra.mxu0 %v327
        %v504 = vpop.f32.mrf.mxu0
        %v505 = vadd.f32 %v319, %v504
        %506 = vmatmul.f32.gmra.mxu0 %v330
        %v507 = vpop.f32.mrf.mxu0
        %v508 = vadd.f32 %v319, %v507
        %509 = vmatmul.f32.gmra.mxu0 %v333
        %v510 = vpop.f32.mrf.mxu0
        %v511 = vadd.f32 %v319, %v510
        %512 = vmatmul.f32.gmra.mxu0 %v336
        %v513 = vpop.f32.mrf.mxu0
        %v514 = vadd.f32 %v319, %v513
        %515 = vmatmul.f32.gmra.mxu0 %v339
        %v516 = vpop.f32.mrf.mxu0
        %v517 = vadd.f32 %v319, %v516
        %518 = vmatmul.f32.gmra.mxu0 %v342
        %v519 = vpop.f32.mrf.mxu0
        %v520 = vadd.f32 %v319, %v519
        %521 = vmatmul.f32.gmra.mxu0 %v345
        %v522 = vpop.f32.mrf.mxu0
        %v523 = vadd.f32 %v319, %v522
        %524 = vmatmul.f32.gmra.mxu0 %v348
        %v525 = vpop.f32.mrf.mxu0
        %v526 = vadd.f32 %v319, %v525
        %527 = vmatmul.f32.gmra.mxu0 %v351
        %v528 = vpop.f32.mrf.mxu0
        %v529 = vadd.f32 %v319, %v528
        %530 = vmatmul.f32.gmra.mxu0 %v354
        %v531 = vpop.f32.mrf.mxu0
        %v532 = vadd.f32 %v319, %v531
        %533 = vmatmul.f32.gmra.mxu0 %v357
        %v534 = vpop.f32.mrf.mxu0
        %v535 = vadd.f32 %v319, %v534
        %536 = vmatmul.f32.gmra.mxu0 %v360
        %v537 = vpop.f32.mrf.mxu0
        %v538 = vadd.f32 %v319, %v537
        %539 = vmatmul.f32.gmra.mxu0 %v363
        %v540 = vpop.f32.mrf.mxu0
        %v541 = vadd.f32 %v319, %v540
        %542 = vmatmul.f32.gmra.mxu0 %v366
        %v543 = vpop.f32.mrf.mxu0
        %v544 = vadd.f32 %v319, %v543
        %545 = vmatmul.f32.gmra.mxu0 %v369
        %v546 = vpop.f32.mrf.mxu0
        %v547 = vadd.f32 %v319, %v546
        %548 = vmatmul.f32.gmra.mxu0 %v372
        %v549 = vpop.f32.mrf.mxu0
        %v550 = vadd.f32 %v319, %v549
        %551 = vmatmul.f32.gmra.mxu0 %v375
        %v552 = vpop.f32.mrf.mxu0
        %v553 = vadd.f32 %v319, %v552
        %554 = vmatmul.f32.gmra.mxu0 %v378
        %v555 = vpop.f32.mrf.mxu0
        %v556 = vadd.f32 %v319, %v555
        %557 = vmatmul.f32.gmra.mxu0 %v381
        %v558 = vpop.f32.mrf.mxu0
        %v559 = vadd.f32 %v319, %v558
        %560 = vmatmul.f32.gmra.mxu0 %v384
        %v561 = vpop.f32.mrf.mxu0
        %v562 = vadd.f32 %v319, %v561
        %563 = vmatmul.f32.gmra.mxu0 %v387
        %v564 = vpop.f32.mrf.mxu0
        %v565 = vadd.f32 %v319, %v564
        %566 = vmatmul.f32.gmra.mxu0 %v390
        %v567 = vpop.f32.mrf.mxu0
        %v568 = vadd.f32 %v319, %v567
        %569 = vmatmul.f32.gmra.mxu0 %v393
        %v570 = vpop.f32.mrf.mxu0
        %v571 = vadd.f32 %v319, %v570
        %572 = vdwg.mxu0
        %s573 = sld [smem:[#allocation2]]
        %s574 = sld [smem:[#allocation2 + $0x1]]
        %v575 = vmul.f32 %v502, 0.5
        %v576 = vmul.f32 %v505, 0.5
        %v577 = vmul.f32 %v508, 0.5
        %v578 = vmul.f32 %v511, 0.5
        %v579 = vmul.f32 %v514, 0.5
        %v580 = vmul.f32 %v517, 0.5
        %v581 = vmul.f32 %v520, 0.5
        %v582 = vmul.f32 %v523, 0.5
        %v583 = vmul.f32 %v526, 0.5
        %v584 = vmul.f32 %v529, 0.5
        %v585 = vmul.f32 %v532, 0.5
        %v586 = vmul.f32 %v535, 0.5
        %v587 = vmul.f32 %v538, 0.5
        %v588 = vmul.f32 %v541, 0.5
        %v589 = vmul.f32 %v544, 0.5
        %v590 = vmul.f32 %v547, 0.5
        %v591 = vmul.f32 %v550, 0.5
        %v592 = vmul.f32 %v553, 0.5
        %v593 = vmul.f32 %v556, 0.5
        %v594 = vmul.f32 %v559, 0.5
        %v595 = vmul.f32 %v562, 0.5
        %v596 = vmul.f32 %v565, 0.5
        %v597 = vmul.f32 %v568, 0.5
        %v598 = vmul.f32 %v571, 0.5
        %v599 = vtanh.pop %v575
        %v600 = vtanh.pop %v576
        %v601 = vtanh.pop %v577
        %v602 = vtanh.pop %v578
        %v603 = vtanh.pop %v579
        %v604 = vtanh.pop %v580
        %v605 = vtanh.pop %v581
        %v606 = vtanh.pop %v582
        %v607 = vtanh.pop %v583
        %v608 = vtanh.pop %v584
        %v609 = vtanh.pop %v585
        %v610 = vtanh.pop %v586
        %v611 = vtanh.pop %v587
        %v612 = vtanh.pop %v588
        %v613 = vtanh.pop %v589
        %v614 = vtanh.pop %v590
        %v615 = vtanh.pop %v591
        %v616 = vtanh.pop %v592
        %v617 = vtanh.pop %v593
        %v618 = vtanh.pop %v594
        %v619 = vtanh.pop %v595
        %v620 = vtanh.pop %v596
        %v621 = vtanh.pop %v597
        %v622 = vtanh.pop %v598
        %v623 = vstv %s574
        %v624 = vmul.f32 %v623, %v599
        %v625 = vmul.f32 %v623, %v600
        %v626 = vmul.f32 %v623, %v601
        %v627 = vmul.f32 %v623, %v602
        %v628 = vmul.f32 %v623, %v603
        %v629 = vmul.f32 %v623, %v604
        %v630 = vmul.f32 %v623, %v605
        %v631 = vmul.f32 %v623, %v606
        %v632 = vmul.f32 %v623, %v607
        %v633 = vmul.f32 %v623, %v608
        %v634 = vmul.f32 %v623, %v609
        %v635 = vmul.f32 %v623, %v610
        %v636 = vmul.f32 %v623, %v611
        %v637 = vmul.f32 %v623, %v612
        %v638 = vmul.f32 %v623, %v613
        %v639 = vmul.f32 %v623, %v614
        %v640 = vmul.f32 %v623, %v615
        %v641 = vmul.f32 %v623, %v616
        %v642 = vmul.f32 %v623, %v617
        %v643 = vmul.f32 %v623, %v618
        %v644 = vmul.f32 %v623, %v619
        %v645 = vmul.f32 %v623, %v620
        %v646 = vmul.f32 %v623, %v621
        %v647 = vmul.f32 %v623, %v622
        %v648 = vstv %s573
        %v649 = vadd.f32 %v648, %v624
        %v650 = vadd.f32 %v648, %v625
        %v651 = vadd.f32 %v648, %v626
        %v652 = vadd.f32 %v648, %v627
        %v653 = vadd.f32 %v648, %v628
        %v654 = vadd.f32 %v648, %v629
        %v655 = vadd.f32 %v648, %v630
        %v656 = vadd.f32 %v648, %v631
        %v657 = vadd.f32 %v648, %v632
        %v658 = vadd.f32 %v648, %v633
        %v659 = vadd.f32 %v648, %v634
        %v660 = vadd.f32 %v648, %v635
        %v661 = vadd.f32 %v648, %v636
        %v662 = vadd.f32 %v648, %v637
        %v663 = vadd.f32 %v648, %v638
        %v664 = vadd.f32 %v648, %v639
        %v665 = vadd.f32 %v648, %v640
        %v666 = vadd.f32 %v648, %v641
        %v667 = vadd.f32 %v648, %v642
        %v668 = vadd.f32 %v648, %v643
        %v669 = vadd.f32 %v648, %v644
        %v670 = vadd.f32 %v648, %v645
        %v671 = vadd.f32 %v648, %v646
        %v672 = vadd.f32 %v648, %v647
        %v673 = vmul.f32 %v413, %v649
        %v674 = vmul.f32 %v416, %v650
        %v675 = vmul.f32 %v419, %v651
        %v676 = vmul.f32 %v422, %v652
        %v677 = vmul.f32 %v425, %v653
        %v678 = vmul.f32 %v428, %v654
        %v679 = vmul.f32 %v431, %v655
        %v680 = vmul.f32 %v434, %v656
        %v681 = vmul.f32 %v437, %v657
        %v682 = vmul.f32 %v440, %v658
        %v683 = vmul.f32 %v443, %v659
        %v684 = vmul.f32 %v446, %v660
        %v685 = vmul.f32 %v449, %v661
        %v686 = vmul.f32 %v452, %v662
        %v687 = vmul.f32 %v455, %v663
        %v688 = vmul.f32 %v458, %v664
        %v689 = vmul.f32 %v461, %v665
        %v690 = vmul.f32 %v464, %v666
        %v691 = vmul.f32 %v467, %v667
        %v692 = vmul.f32 %v470, %v668
        %v693 = vmul.f32 %v473, %v669
        %v694 = vmul.f32 %v476, %v670
        %v695 = vmul.f32 %v479, %v671
        %v696 = vmul.f32 %v482, %v672
        %697 = vst [vmem:[%s274] sm:$0xff] %v673
        %698 = vst [vmem:[%s274 + $0x8] sm:$0xff] %v674
        %699 = vst [vmem:[%s274 + $0x10] sm:$0xff] %v675
        %700 = vst [vmem:[%s274 + $0x18] sm:$0xff] %v676
        %701 = vst [vmem:[%s274 + $0x20] sm:$0xff] %v677
        %702 = vst [vmem:[%s274 + $0x28] sm:$0xff] %v678
        %703 = vst [vmem:[%s274 + $0x30] sm:$0xff] %v679
        %704 = vst [vmem:[%s274 + $0x38] sm:$0xff] %v680
        %705 = vst [vmem:[%s274 + $0x40] sm:$0xff] %v681
        %706 = vst [vmem:[%s274 + $0x48] sm:$0xff] %v682
        %707 = vst [vmem:[%s274 + $0x50] sm:$0xff] %v683
        %708 = vst [vmem:[%s274 + $0x58] sm:$0xff] %v684
        %709 = vst [vmem:[%s274 + $0x60] sm:$0xff] %v685
        %710 = vst [vmem:[%s274 + $0x68] sm:$0xff] %v686
        %711 = vst [vmem:[%s274 + $0x70] sm:$0xff] %v687
        %712 = vst [vmem:[%s274 + $0x78] sm:$0xff] %v688
        %713 = vst [vmem:[%s274 + $0x80] sm:$0xff] %v689
        %714 = vst [vmem:[%s274 + $0x88] sm:$0xff] %v690
        %715 = vst [vmem:[%s274 + $0x90] sm:$0xff] %v691
        %716 = vst [vmem:[%s274 + $0x98] sm:$0xff] %v692
        %717 = vst [vmem:[%s274 + $0xa0] sm:$0xff] %v693
        %718 = vst [vmem:[%s274 + $0xa8] sm:$0xff] %v694
        %719 = vst [vmem:[%s274 + $0xb0] sm:$0xff] %v695
        %720 = vst [vmem:[%s274 + $0xb8] sm:$0xff] %v696
        %s721 = smul.u32 24, %s20
        %p722 = scmp.lt.s32.totalorder %s721, 47
        %s723 = scalar_select %p722, %s721, 47
        %p724 = scmp.lt.s32.totalorder %s21, 0
        %s725 = scalar_select %p724, %s21, 0
        %s726 = sadd.s32 %s725, %s723
        %s727 = smul.addr %s726, 8
        %s728 = scalar_lea.vmem %s4, %s727
        // Predicated region
        $region41: #{pa_gating_forward.1} parent=35 // pred_check
          %p729 = pneg %p147
        $region42: #{pa_gating_forward.1} parent=35 // pred_check_branch
          %731 = sbr.rel (%p729) target = $region44
        $region43: #{pa_gating_forward.1} parent=35 // pred_region
          %s732 = smul.u32 24, %s20
        $region44: #{pa_gating_forward.1} parent=35 // pred_fallthru
          _
      $region36: #{pa_gating_forward.1} parent=5 // pred_fallthru
        _
      %p733 = scmp.le.s32.totalorder 2, %s11
      // Predicated region
      $region45: #{pa_gating_forward.1} parent=5 // pred_check
        %p734 = pneg %p733
      $region46: #{pa_gating_forward.1} parent=5 // pred_check_branch
        %736 = sbr.rel (%p734) target = $region48
      $region47: #{pa_gating_forward.1} parent=5 // pred_region
        %s737 = ssub.s32 %s11, 2
        // Predicated region
        $region49: #{pa_gating_forward.1} parent=47 // pred_check
          %p738 = pneg %p153
        $region50: #{pa_gating_forward.1} parent=47 // pred_check_branch
          %740 = sbr.rel (%p738) target = $region52
        $region51: #{pa_gating_forward.1} parent=47 // pred_region
          %s741 = smul.u32 24, %s22
          %p742 = scmp.lt.s32.totalorder %s741, 47
          %s743 = scalar_select %p742, %s741, 47
          %p744 = scmp.lt.s32.totalorder %s23, 0
          %s745 = scalar_select %p744, %s23, 0
          %s746 = sadd.s32 %s745, %s743
          %s747 = smul.addr %s746, 8
          %s748 = scalar_lea.vmem %s4, %s747
        $region52: #{pa_gating_forward.1} parent=47 // pred_fallthru
          _
      $region48: #{pa_gating_forward.1} parent=5 // pred_fallthru
        _
    $region6: #{pa_gating_forward.1} parent=1 // loop_footer
      %s15 = sadd.s32 1, %s11
    $region7: #{pa_gating_forward.1} parent=1 // loop_footer_branch
      %10 = sbr.rel target = $region3
    $region8: #{pa_gating_forward.1} parent=1 // loop_exit
      _
    %749 = vsyncpa [#allocation3], 1
    %s750 = scalar_lea.sflag [#allocation3], 1
    %751 = vsyncpa %s750, 1

</llo_original>
